<compile_context>
chip_gen: v7x
topology: tpu7x:2x2x1
jax: 0.10.0
libtpu: 0.0.40
codegen_flags: <defaults>
</compile_context>

<pallas_src>
import functools

import jax
import jax.numpy as jnp
from jax import lax
from jax.experimental import pallas as pl
from jax.experimental.pallas import tpu as pltpu

_LANE = 128
_SUBLANE = 8
# VMEM budget used to size the batch tile; leaves headroom under the 32 MiB
# scoped limit requested below (safe on v5e/v6e/v7x).
_VMEM_BUDGET_BYTES = 24 * 1024 * 1024
_VMEM_LIMIT_BYTES = 32 * 1024 * 1024
_NUM_CORES = 2  # leading "parallel" grid axis (used by v7x megacore; ~free elsewhere)


def _round_up(x, m):
    return -(-x // m) * m


def _pow_int(w, p):
    """w**p for a small static non-negative integer p (exponentiation by squaring)."""
    acc = None
    base = w
    while p > 0:
        if p & 1:
            acc = base if acc is None else acc * base
        p >>= 1
        if p:
            base = base * base
    return jnp.ones_like(w) if acc is None else acc


def _focal_loss_kernel(alpha, n_samples, tile_n, tile_offset, tiles_per_core,
                       logits_ref, labels_ref, num_ref, den_ref,
                       num_acc, den_acc):
    core = pl.program_id(0)   # parallel axis (one slice per TensorCore on v7x)
    j = pl.program_id(1)      # reduction axis over batch tiles

    @pl.when(j == 0)
    def _init():
        num_acc[...] = jnp.zeros_like(num_acc)
        den_acc[...] = jnp.zeros_like(den_acc)

    x = logits_ref[...].astype(jnp.float32)               # (C, TN)
    lbl = labels_ref[...]                                  # (1, TN) int32
    c, tn = x.shape

    # Global tile index for this step.  Core 0 owns tiles [0, tiles_per_core),
    # core 1 owns tiles [tile_offset, tile_offset + tiles_per_core); when the
    # tile count is odd the one overlapping tile is owned by core 0 only, and
    # the ragged tail of the last tile is masked here — so the wrapper never
    # has to pad the inputs in HBM.
    g = core * tile_offset + j
    col = lax.broadcasted_iota(jnp.int32, (1, tn), 1)
    valid = (g * tile_n + col) < n_samples                 # (1, TN)
    owned = jnp.logical_or(core == 0, g >= tiles_per_core)
    valid = jnp.logical_and(valid, owned)

    # Numerically-stable softmax statistics over the class (sublane) axis.
    m = jnp.max(x, axis=0, keepdims=True)                  # (1, TN)
    class_ids = lax.broadcasted_iota(jnp.int32, (c, tn), 0)
    onehot = class_ids == lbl                               # (C, TN)
    logit_true = jnp.sum(jnp.where(onehot, x, 0.0), axis=0, keepdims=True)

    e = jnp.exp(x - m)                                      # (C, TN)
    # Sum of the *non-true* exponentials: gives 1 - p_true directly, without
    # the catastrophic cancellation of 1 - exp(-loss) (and without expm1).
    s_excl = jnp.sum(jnp.where(onehot, 0.0, e), axis=0, keepdims=True)
    e_true = jnp.exp(logit_true - m)                        # (1, TN)
    s = s_excl + e_true                                     # sum_c exp(x_c - m) > 0

    lse = jnp.log(s) + m
    loss = jnp.where(valid, lse - logit_true, 0.0)          # per-sample CE, 0 on padding
    w = s_excl / s                                          # = 1 - p_true, in [0, 1]

    if float(alpha) != 1.0:
        if float(alpha).is_integer() and 0 <= int(alpha) <= 16:
            w = _pow_int(w, int(alpha))                     # e.g. gamma=2 -> one multiply
        else:
            w = jnp.exp(float(alpha) * jnp.log(w))          # w==0 -> exp(-inf) == 0, no NaN
    w = jnp.where(valid, w, 0.0)

    num_acc[...] += w * loss
    den_acc[...] += w

    @pl.when(j == tiles_per_core - 1)
    def _finalize():
        num = jnp.sum(num_acc[...], axis=1, keepdims=True)  # (1, 1)
        den = jnp.sum(den_acc[...], axis=1, keepdims=True)  # (1, 1)
        num_ref[...] = jnp.broadcast_to(num, num_ref.shape)
        den_ref[...] = jnp.broadcast_to(den, den_ref.shape)


def _derive_tile_n(n, c, itemsize):
    """Largest lane-multiple batch tile whose VMEM footprint fits the budget."""
    # Physical (sublane/lane padded) VMEM bytes per batch column:
    #   double-buffered logits block + double-buffered labels block
    #   + two f32 accumulators (each padded to 8 sublanes).
    c_pad = _round_up(c, _SUBLANE)
    per_col = 2 * c_pad * itemsize + 2 * _SUBLANE * 4 + 2 * _SUBLANE * 4
    tile = max(_LANE, (_VMEM_BUDGET_BYTES // per_col) // _LANE * _LANE)
    if tile >= n:
        return n                                   # single block, exact fit
    n_tiles = -(-n // tile)
    return _round_up(-(-n // n_tiles), _LANE)      # balance blocks across tiles


def focal_loss(logits, labels, alpha=1.0, tile_n=None):
    """Pallas implementation of FocalLoss.forward (returns a scalar)."""
    n, c = logits.shape
    itemsize = jnp.dtype(logits.dtype).itemsize
    if tile_n is None:
        tile_n = _derive_tile_n(n, c, itemsize)
    elif tile_n % _LANE != 0:
        raise ValueError(f"tile_n must be a multiple of {_LANE}, got {tile_n}")
    tile_n = min(tile_n, n)                        # lane dim == full dim is always legal

    n_tiles = pl.cdiv(n, tile_n)
    tiles_per_core = pl.cdiv(n_tiles, _NUM_CORES)
    tile_offset = n_tiles - tiles_per_core         # start tile of core 1 (affine index map)

    # Batch lane-dense layout: kernel consumes logits as (C, N).  Native dtype
    # (e.g. bf16) is preserved through the transpose; the kernel upcasts per
    # tile.  No padding pass: ragged tiles are masked in-kernel.
    # TODO(synk): tile the class axis (online logsumexp) for very wide
    # classifiers (C >~ 4K) so the (C, tile_n) block stays inside v7x's 64 MiB VMEM.
    logits_t = logits.T                                     # (C, N)
    labels_row = labels.astype(jnp.int32).reshape(1, n)     # (1, N), free reshape

    kernel = functools.partial(_focal_loss_kernel, float(alpha), n, tile_n,
                               tile_offset, tiles_per_core)

    num_part, den_part = pl.pallas_call(
        kernel,
        out_shape=(
            jax.ShapeDtypeStruct((_NUM_CORES * _SUBLANE, _LANE), jnp.float32),
            jax.ShapeDtypeStruct((_NUM_CORES * _SUBLANE, _LANE), jnp.float32),
        ),
        grid_spec=pltpu.PrefetchScalarGridSpec(
            num_scalar_prefetch=0,
            grid=(_NUM_CORES, tiles_per_core),
            in_specs=[
                pl.BlockSpec((c, tile_n), lambda ci, j: (0, ci * tile_offset + j)),
                pl.BlockSpec((1, tile_n), lambda ci, j: (0, ci * tile_offset + j)),
            ],
            out_specs=[
                pl.BlockSpec((_SUBLANE, _LANE), lambda ci, j: (ci, 0)),
                pl.BlockSpec((_SUBLANE, _LANE), lambda ci, j: (ci, 0)),
            ],
            scratch_shapes=[
                pltpu.VMEM((1, tile_n), jnp.float32),   # per-lane sum(w * loss)
                pltpu.VMEM((1, tile_n), jnp.float32),   # per-lane sum(w)
            ],
        ),
        compiler_params=pltpu.CompilerParams(
            dimension_semantics=("parallel", "arbitrary"),
            vmem_limit_bytes=_VMEM_LIMIT_BYTES,
        ),
    )(logits_t, labels_row)

    num = jnp.sum(num_part[0::_SUBLANE, 0])   # one partial per core
    den = jnp.sum(den_part[0::_SUBLANE, 0])
    # sum(w/sum(w) * loss) == sum(w*loss)/sum(w); 0/0 -> NaN matches the torch
    # reference when every weight is zero (intentional).
    return num / den


def _focal_loss_ref(logits, labels, alpha=1.0):
    logits = logits.astype(jnp.float32)
    lse = jax.nn.logsumexp(logits, axis=1)
    loss = lse - jnp.take_along_axis(logits, labels[:, None], axis=1)[:, 0]
    probs = jax.nn.softmax(logits, axis=1)
    onehot = jax.nn.one_hot(labels, logits.shape[1], dtype=jnp.float32)
    w = 1.0 - jnp.sum(onehot * probs, axis=1)
    w = w ** alpha
    w = w / jnp.sum(w)
    return jnp.sum(w * loss)


if __name__ == "__main__":
    key = jax.random.PRNGKey(0)

    # Test 1: tiny shape matching the module (single tile, alpha=1, derived tile).
    k1, k2 = jax.random.split(key)
    n1, c1 = 8, 16
    logits1 = jax.random.normal(k1, (n1, c1), dtype=jnp.float32)
    labels1 = jax.random.randint(k2, (n1,), 0, c1, dtype=jnp.int32)
    out1 = focal_loss(logits1, labels1, alpha=1.0)
    jax.block_until_ready(out1)
    ref1 = _focal_loss_ref(logits1, labels1, alpha=1.0)
    assert jnp.allclose(out1, ref1, rtol=1e-4, atol=1e-5), (out1, ref1)

    # Test 2: multi-tile grid, ragged last tile, both grid "cores", integer alpha.
    k3, k4 = jax.random.split(k1)
    n2, c2 = 300, 10
    logits2 = jax.random.normal(k3, (n2, c2), dtype=jnp.float32)
    labels2 = jax.random.randint(k4, (n2,), 0, c2, dtype=jnp.int32)
    out2 = focal_loss(logits2, labels2, alpha=2.0, tile_n=128)
    jax.block_until_ready(out2)
    ref2 = _focal_loss_ref(logits2, labels2, alpha=2.0)
    assert jnp.allclose(out2, ref2, rtol=1e-4, atol=1e-5), (out2, ref2)

    # Test 3: non-integer alpha (exp/log path) + bf16 logits pass-through.
    k5, k6 = jax.random.split(k3)
    n3, c3 = 200, 12
    logits3 = jax.random.normal(k5, (n3, c3), dtype=jnp.bfloat16)
    labels3 = jax.random.randint(k6, (n3,), 0, c3, dtype=jnp.int32)
    out3 = focal_loss(logits3, labels3, alpha=2.5)
    jax.block_until_ready(out3)
    ref3 = _focal_loss_ref(logits3, labels3, alpha=2.5)
    assert jnp.allclose(out3, ref3, rtol=1e-3, atol=1e-4), (out3, ref3)

    print("KERNEL_OK")
</pallas_src>

<mosaic_0001>
module attributes {stable_mosaic.version = 11 : i64} {
  func.func @_focal_loss_kernel(%arg0: i32, %arg1: i32, %arg2: memref<16x8xf32, #tpu.memory_space<vmem>>, %arg3: memref<1x8xi32, #tpu.memory_space<vmem>>, %arg4: memref<8x128xf32, #tpu.memory_space<vmem>>, %arg5: memref<8x128xf32, #tpu.memory_space<vmem>>, %arg6: memref<1x8xf32, #tpu.memory_space<vmem>>, %arg7: memref<1x8xf32, #tpu.memory_space<vmem>>) attributes {dimension_semantics = [#tpu.dimension_semantics<parallel>, #tpu.dimension_semantics<arbitrary>], iteration_bounds = array<i64: 2, 1>, scalar_prefetch = 0 : i64, scratch_operands = 2 : i64, tpu.core_type = #tpu.core_type<tc>, window_params = [{transform_indices = @transform_0, window_bounds = array<i64: 16, 8>}, {transform_indices = @transform_1, window_bounds = array<i64: 1, 8>}, {transform_indices = @transform_2, window_bounds = array<i64: 8, 128>}, {transform_indices = @transform_3, window_bounds = array<i64: 8, 128>}]} {
    %c0_i32 = arith.constant 0 : i32
    %0 = arith.cmpi eq, %arg1, %c0_i32 : i32
    %1 = arith.extui %0 : i1 to i32
    %c0_i32_0 = arith.constant 0 : i32
    %2 = arith.cmpi ne, %1, %c0_i32_0 : i32
    scf.if %2 {
      %cst_23 = arith.constant 0.000000e+00 : f32
      %55 = vector.broadcast %cst_23 : f32 to vector<1x8xf32>
      %c0_24 = arith.constant 0 : index
      %c0_25 = arith.constant 0 : index
      %56 = vector.load %arg6[%c0_24, %c0_25] : memref<1x8xf32, #tpu.memory_space<vmem>>, vector<1x8xf32>
      tpu.vector_store %arg6[%c0_24, %c0_25], %55 {strides = array<i32>} : memref<1x8xf32, #tpu.memory_space<vmem>>, vector<1x8xf32>,
      %cst_26 = arith.constant 0.000000e+00 : f32
      %57 = vector.broadcast %cst_26 : f32 to vector<1x8xf32>
      %c0_27 = arith.constant 0 : index
      %c0_28 = arith.constant 0 : index
      %58 = vector.load %arg7[%c0_27, %c0_28] : memref<1x8xf32, #tpu.memory_space<vmem>>, vector<1x8xf32>
      tpu.vector_store %arg7[%c0_27, %c0_28], %57 {strides = array<i32>} : memref<1x8xf32, #tpu.memory_space<vmem>>, vector<1x8xf32>,
    } else {
    }
    %c0 = arith.constant 0 : index
    %c0_1 = arith.constant 0 : index
    %3 = vector.load %arg2[%c0, %c0_1] : memref<16x8xf32, #tpu.memory_space<vmem>>, vector<16x8xf32>
    %c0_2 = arith.constant 0 : index
    %c0_3 = arith.constant 0 : index
    %4 = vector.load %arg3[%c0_2, %c0_3] : memref<1x8xi32, #tpu.memory_space<vmem>>, vector<1x8xi32>
    %c0_i32_4 = arith.constant 0 : i32
    %5 = arith.muli %arg0, %c0_i32_4 : i32
    %6 = arith.addi %5, %arg1 : i32
    %7 = tpu.iota {dimensions = array<i32: 1>} : vector<1x8xi32>
    %c8_i32 = arith.constant 8 : i32
    %8 = arith.muli %6, %c8_i32 : i32
    %9 = vector.broadcast %8 : i32 to vector<1x8xi32>
    %10 = arith.addi %9, %7 : vector<1x8xi32>
    %c8_i32_5 = arith.constant 8 : i32
    %11 = vector.broadcast %c8_i32_5 : i32 to vector<1x8xi32>
    %12 = arith.cmpi slt, %10, %11 : vector<1x8xi32>
    %c0_i32_6 = arith.constant 0 : i32
    %13 = arith.cmpi eq, %arg0, %c0_i32_6 : i32
    %c1_i32 = arith.constant 1 : i32
    %14 = arith.cmpi sge, %6, %c1_i32 : i32
    %15 = arith.ori %13, %14 : i1
    %16 = vector.broadcast %15 : i1 to vector<1x8xi1>
    %17 = arith.andi %12, %16 : vector<1x8xi1>
    %cst = arith.constant dense<0xFF800000> : vector<8xf32>
    %18 = vector.multi_reduction <maximumf>, %3, %cst [0] : vector<16x8xf32> to vector<8xf32>
    %19 = vector.shape_cast %18 : vector<8xf32> to vector<1x8xf32>
    %20 = tpu.iota {dimensions = array<i32: 0>} : vector<16x8xi32>
    %21 = vector.broadcast %4 : vector<1x8xi32> to vector<16x8xi32>
    %22 = arith.cmpi eq, %20, %21 : vector<16x8xi32>
    %cst_7 = arith.constant 0.000000e+00 : f32
    %23 = vector.broadcast %cst_7 : f32 to vector<16x8xf32>
    %24 = arith.select %22, %3, %23 : vector<16x8xi1>, vector<16x8xf32>
    %cst_8 = arith.constant dense<0.000000e+00> : vector<8xf32>
    %25 = vector.multi_reduction <add>, %24, %cst_8 [0] : vector<16x8xf32> to vector<8xf32>
    %26 = vector.shape_cast %25 : vector<8xf32> to vector<1x8xf32>
    %27 = vector.broadcast %19 : vector<1x8xf32> to vector<16x8xf32>
    %28 = arith.subf %3, %27 : vector<16x8xf32>
    %29 = math.exp %28 : vector<16x8xf32>
    %cst_9 = arith.constant 0.000000e+00 : f32
    %30 = vector.broadcast %cst_9 : f32 to vector<16x8xf32>
    %31 = arith.select %22, %30, %29 : vector<16x8xi1>, vector<16x8xf32>
    %cst_10 = arith.constant dense<0.000000e+00> : vector<8xf32>
    %32 = vector.multi_reduction <add>, %31, %cst_10 [0] : vector<16x8xf32> to vector<8xf32>
    %33 = vector.shape_cast %32 : vector<8xf32> to vector<1x8xf32>
    %34 = arith.subf %26, %19 : vector<1x8xf32>
    %35 = math.exp %34 : vector<1x8xf32>
    %36 = arith.addf %33, %35 : vector<1x8xf32>
    %37 = math.log %36 : vector<1x8xf32>
    %38 = arith.addf %37, %19 : vector<1x8xf32>
    %39 = arith.subf %38, %26 : vector<1x8xf32>
    %cst_11 = arith.constant 0.000000e+00 : f32
    %40 = vector.broadcast %cst_11 : f32 to vector<1x8xf32>
    %41 = arith.select %17, %39, %40 : vector<1x8xi1>, vector<1x8xf32>
    %42 = arith.divf %33, %36 : vector<1x8xf32>
    %cst_12 = arith.constant 0.000000e+00 : f32
    %43 = vector.broadcast %cst_12 : f32 to vector<1x8xf32>
    %44 = arith.select %17, %42, %43 : vector<1x8xi1>, vector<1x8xf32>
    %c0_13 = arith.constant 0 : index
    %c0_14 = arith.constant 0 : index
    %45 = vector.load %arg6[%c0_13, %c0_14] : memref<1x8xf32, #tpu.memory_space<vmem>>, vector<1x8xf32>
    %46 = arith.mulf %44, %41 : vector<1x8xf32>
    %47 = arith.addf %45, %46 : vector<1x8xf32>
    %c0_15 = arith.constant 0 : index
    %c0_16 = arith.constant 0 : index
    %48 = vector.load %arg6[%c0_15, %c0_16] : memref<1x8xf32, #tpu.memory_space<vmem>>, vector<1x8xf32>
    tpu.vector_store %arg6[%c0_15, %c0_16], %47 {strides = array<i32>} : memref<1x8xf32, #tpu.memory_space<vmem>>, vector<1x8xf32>,
    %c0_17 = arith.constant 0 : index
    %c0_18 = arith.constant 0 : index
    %49 = vector.load %arg7[%c0_17, %c0_18] : memref<1x8xf32, #tpu.memory_space<vmem>>, vector<1x8xf32>
    %50 = arith.addf %49, %44 : vector<1x8xf32>
    %c0_19 = arith.constant 0 : index
    %c0_20 = arith.constant 0 : index
    %51 = vector.load %arg7[%c0_19, %c0_20] : memref<1x8xf32, #tpu.memory_space<vmem>>, vector<1x8xf32>
    tpu.vector_store %arg7[%c0_19, %c0_20], %50 {strides = array<i32>} : memref<1x8xf32, #tpu.memory_space<vmem>>, vector<1x8xf32>,
    %c0_i32_21 = arith.constant 0 : i32
    %52 = arith.cmpi eq, %arg1, %c0_i32_21 : i32
    %53 = arith.extui %52 : i1 to i32
    %c0_i32_22 = arith.constant 0 : i32
    %54 = arith.cmpi ne, %53, %c0_i32_22 : i32
    scf.if %54 {
      %c0_23 = arith.constant 0 : index
      %c0_24 = arith.constant 0 : index
      %55 = vector.load %arg6[%c0_23, %c0_24] : memref<1x8xf32, #tpu.memory_space<vmem>>, vector<1x8xf32>
      %cst_25 = arith.constant dense<0.000000e+00> : vector<1xf32>
      %56 = vector.multi_reduction <add>, %55, %cst_25 [1] : vector<1x8xf32> to vector<1xf32>
      %57 = vector.shape_cast %56 : vector<1xf32> to vector<1x1xf32>
      %c0_26 = arith.constant 0 : index
      %c0_27 = arith.constant 0 : index
      %58 = vector.load %arg7[%c0_26, %c0_27] : memref<1x8xf32, #tpu.memory_space<vmem>>, vector<1x8xf32>
      %cst_28 = arith.constant dense<0.000000e+00> : vector<1xf32>
      %59 = vector.multi_reduction <add>, %58, %cst_28 [1] : vector<1x8xf32> to vector<1xf32>
      %60 = vector.shape_cast %59 : vector<1xf32> to vector<1x1xf32>
      %61 = vector.shape_cast %57 : vector<1x1xf32> to vector<1x1xf32>
      %62 = vector.broadcast %61 : vector<1x1xf32> to vector<8x128xf32>
      %c0_29 = arith.constant 0 : index
      %c0_30 = arith.constant 0 : index
      %63 = vector.load %arg4[%c0_29, %c0_30] : memref<8x128xf32, #tpu.memory_space<vmem>>, vector<8x128xf32>
      tpu.vector_store %arg4[%c0_29, %c0_30], %62 {strides = array<i32>} : memref<8x128xf32, #tpu.memory_space<vmem>>, vector<8x128xf32>,
      %64 = vector.shape_cast %60 : vector<1x1xf32> to vector<1x1xf32>
      %65 = vector.broadcast %64 : vector<1x1xf32> to vector<8x128xf32>
      %c0_31 = arith.constant 0 : index
      %c0_32 = arith.constant 0 : index
      %66 = vector.load %arg5[%c0_31, %c0_32] : memref<8x128xf32, #tpu.memory_space<vmem>>, vector<8x128xf32>
      tpu.vector_store %arg5[%c0_31, %c0_32], %65 {strides = array<i32>} : memref<8x128xf32, #tpu.memory_space<vmem>>, vector<8x128xf32>,
    } else {
    }
    return
  }
  func.func @transform_0(%arg0: i32, %arg1: i32) -> (i32, i32) {
    %c0_i32 = arith.constant 0 : i32
    %0 = arith.muli %arg0, %c0_i32 : i32
    %1 = arith.addi %0, %arg1 : i32
    %c0_i32_0 = arith.constant 0 : i32
    %c0_i32_1 = arith.constant 0 : i32
    return %c0_i32_0, %1 : i32, i32
  }
  func.func @transform_1(%arg0: i32, %arg1: i32) -> (i32, i32) {
    %c0_i32 = arith.constant 0 : i32
    %0 = arith.muli %arg0, %c0_i32 : i32
    %1 = arith.addi %0, %arg1 : i32
    %c0_i32_0 = arith.constant 0 : i32
    %c0_i32_1 = arith.constant 0 : i32
    return %c0_i32_0, %1 : i32, i32
  }
  func.func @transform_2(%arg0: i32, %arg1: i32) -> (i32, i32) {
    %c0_i32 = arith.constant 0 : i32
    %c0_i32_0 = arith.constant 0 : i32
    return %arg0, %c0_i32 : i32, i32
  }
  func.func @transform_3(%arg0: i32, %arg1: i32) -> (i32, i32) {
    %c0_i32 = arith.constant 0 : i32
    %c0_i32_0 = arith.constant 0 : i32
    return %arg0, %c0_i32 : i32, i32
  }
}

</mosaic_0001>

<llo_original>
// kernel: tpu_custom_call.1
$region0: #{tpu_custom_call.1}
  #allocation0 [shape = 'u32[]', space=smem, size = 0x4, offset = 0x4, fixed_abs, tag = 'smem constant byte address 0x4 - core index']
  #allocation1 [shape = 'u32[144,128]{1,0:T(1,128)}', space=vmem, size = 0x12000, scoped, tag = 'internal scratch']
  #allocation2 [shape = 'f32[1,8]{1,0:T(1,128)}', space=vmem, size = 0x200, scoped, tag = 'scratch operand']
  #allocation3 [shape = 'f32[1,8]{1,0:T(1,128)}', space=vmem, size = 0x200, scoped, tag = 'scratch operand']
  %s0 = inlined_call_operand.vmem [shape: f32[16,8], index: 0, kind: input, shape index: {}]
  %s1 = inlined_call_operand.vmem [shape: s32[1,8], index: 1, kind: input, shape index: {}]
  %s2 = inlined_call_operand.hbm [shape: f32[16,128], index: 2, kind: output, shape index: {0}]
  %s3 = inlined_call_operand.hbm [shape: f32[16,128], index: 3, kind: output, shape index: {1}]
  %4 = xla_tuple %s2, %s3
  %s5 = sld [smem:[#allocation0]]
  $region57: #{tpu_custom_call.1} parent=0
    _
  %s7 = ssub.s32 1, %s5
  %s8 = scalar_select 0, %s7, %s5
  $region1: #{tpu_custom_call.1} parent=0
    #allocation4 [shape = 'u8[8192]{0}', space=vmem, size = 0x2000, scoped, tag = 'output window, operand 0']
    #allocation5 [shape = 's32[2]{0}', space=sflag, size = 0x8, scoped, tag = 'scoped memory for tpu_custom_call.1']
    #allocation6 [shape = 'u8[8192]{0}', space=vmem, size = 0x2000, scoped, tag = 'output window, operand 1']
    #allocation7 [shape = 's32[2]{0}', space=sflag, size = 0x8, scoped, tag = 'scoped memory for tpu_custom_call.1']
    %9 = vsyncpa [#allocation5], 0
    %s10 = scalar_lea.sflag [#allocation5], 1
    %11 = vsyncpa %s10, 0
    %12 = vsyncpa [#allocation7], 0
    %s13 = scalar_lea.sflag [#allocation7], 1
    %14 = vsyncpa %s13, 0
    loop: start=0, step=1, limit=4
    $region2: #{tpu_custom_call.1} parent=1 // loop_pre_header
      _
    $region3: #{tpu_custom_call.1} parent=1 // loop_header
      %s16 = sphi 0, %s20
      %p17 = scmp.ge.s32.totalorder %s16, 4
      %s23 = sphi 0, %s35
      %s24 = sphi 0, %s31
      %s25 = sphi 0, %s23
      %s26 = sphi 0, %s24
      %s27 = sphi 0, %s25
      %s28 = sphi 0, %s26
      %s38 = sphi 0, %s40
      %s41 = sphi 0, %s38
      %s42 = sphi 0, %s41
      %s58 = sphi 0, %s42
      %s64 = sphi 0, %s66
      %s67 = sphi 0, %s64
      %s68 = sphi 0, %s67
      %s84 = sphi 0, %s68
      %s90 = sphi 0, %s92
      %s93 = sphi 0, %s90
      %s94 = sphi 0, %s93
      %s110 = sphi 0, %s94
      %s116 = sphi 0, %s118
      %s119 = sphi 0, %s116
      %s120 = sphi 0, %s119
      %s136 = sphi 0, %s120
    $region4: #{tpu_custom_call.1} parent=1 // loop_header_branch
      %19 = sbr.rel (%p17) target = $region8
    $region5: #{tpu_custom_call.1} parent=1 // loop_body
      %s21 = ssub.s32 %s16, 1
      %s22 = ssub.s32 %s16, 2
      %s29 = sadd.s32 1, %s24
      %p30 = scmp.ge.s32.totalorder %s29, 1
      %s31 = scalar_select %p30, 0, %s29
      %s32 = sadd.s32 1, %s23
      %s33 = scalar_select %p30, %s32, %s23
      %p34 = scmp.ge.s32.totalorder %s33, 2
      %s35 = scalar_select %p34, 0, %s33
      %s36 = ssub.s32 %s24, %s31
      %p37 = scmp.eq.s32.totalorder %s36, 0
      %s39 = sadd.s32 %s38, 1
      %s40 = scalar_select %p37, %s38, %s39
      %p43 = pneg %p37
      %p44 = scmp.eq.s32.totalorder %s16, 1
      %p45 = por %p43, %p44
      %p46 = scmp.ne.s32.totalorder %s38, %s41
      %p47 = scmp.eq.s32.totalorder %s16, 0
      %p48 = por %p46, %p47
      %p49 = scmp.ne.s32.totalorder %s38, %s41
      %p50 = scmp.eq.s32.totalorder %s21, 1
      %p51 = por %p49, %p50
      %p52 = scmp.ne.s32.totalorder %s41, %s42
      %p53 = scmp.eq.s32.totalorder %s21, 0
      %p54 = por %p52, %p53
      %p55 = scmp.ne.s32.totalorder %s41, %s42
      %p56 = scmp.eq.s32.totalorder %s22, 1
      %p57 = por %p55, %p56
      %p59 = scmp.ne.s32.totalorder %s42, %s58
      %p60 = scmp.eq.s32.totalorder %s22, 0
      %p61 = por %p59, %p60
      %s62 = ssub.s32 %s24, %s31
      %p63 = scmp.eq.s32.totalorder %s62, 0
      %s65 = sadd.s32 %s64, 1
      %s66 = scalar_select %p63, %s64, %s65
      %p69 = pneg %p63
      %p70 = scmp.eq.s32.totalorder %s16, 1
      %p71 = por %p69, %p70
      %p72 = scmp.ne.s32.totalorder %s64, %s67
      %p73 = scmp.eq.s32.totalorder %s16, 0
      %p74 = por %p72, %p73
      %p75 = scmp.ne.s32.totalorder %s64, %s67
      %p76 = scmp.eq.s32.totalorder %s21, 1
      %p77 = por %p75, %p76
      %p78 = scmp.ne.s32.totalorder %s67, %s68
      %p79 = scmp.eq.s32.totalorder %s21, 0
      %p80 = por %p78, %p79
      %p81 = scmp.ne.s32.totalorder %s67, %s68
      %p82 = scmp.eq.s32.totalorder %s22, 1
      %p83 = por %p81, %p82
      %p85 = scmp.ne.s32.totalorder %s68, %s84
      %p86 = scmp.eq.s32.totalorder %s22, 0
      %p87 = por %p85, %p86
      %s88 = ssub.s32 %s23, %s35
      %p89 = scmp.eq.s32.totalorder %s88, 0
      %s91 = sadd.s32 %s90, 1
      %s92 = scalar_select %p89, %s90, %s91
      %p95 = pneg %p89
      %p96 = scmp.eq.s32.totalorder %s16, 1
      %p97 = por %p95, %p96
      %p98 = scmp.ne.s32.totalorder %s90, %s93
      %p99 = scmp.eq.s32.totalorder %s16, 0
      %p100 = por %p98, %p99
      %p101 = scmp.ne.s32.totalorder %s90, %s93
      %p102 = scmp.eq.s32.totalorder %s21, 1
      %p103 = por %p101, %p102
      %p104 = scmp.ne.s32.totalorder %s93, %s94
      %p105 = scmp.eq.s32.totalorder %s21, 0
      %p106 = por %p104, %p105
      %p107 = scmp.ne.s32.totalorder %s93, %s94
      %p108 = scmp.eq.s32.totalorder %s22, 1
      %p109 = por %p107, %p108
      %p111 = scmp.ne.s32.totalorder %s94, %s110
      %p112 = scmp.eq.s32.totalorder %s22, 0
      %p113 = por %p111, %p112
      %s114 = ssub.s32 %s23, %s35
      %p115 = scmp.eq.s32.totalorder %s114, 0
      %s117 = sadd.s32 %s116, 1
      %s118 = scalar_select %p115, %s116, %s117
      %p121 = pneg %p115
      %p122 = scmp.eq.s32.totalorder %s16, 1
      %p123 = por %p121, %p122
      %p124 = scmp.ne.s32.totalorder %s116, %s119
      %p125 = scmp.eq.s32.totalorder %s16, 0
      %p126 = por %p124, %p125
      %p127 = scmp.ne.s32.totalorder %s116, %s119
      %p128 = scmp.eq.s32.totalorder %s21, 1
      %p129 = por %p127, %p128
      %p130 = scmp.ne.s32.totalorder %s119, %s120
      %p131 = scmp.eq.s32.totalorder %s21, 0
      %p132 = por %p130, %p131
      %p133 = scmp.ne.s32.totalorder %s119, %s120
      %p134 = scmp.eq.s32.totalorder %s22, 1
      %p135 = por %p133, %p134
      %p137 = scmp.ne.s32.totalorder %s120, %s136
      %p138 = scmp.eq.s32.totalorder %s22, 0
      %p139 = por %p137, %p138
      %p140 = scmp.le.s32.totalorder 1, %s16
      %p141 = scmp.lt.s32.totalorder %s16, 3
      %p142 = pnand %p140, %p141
      %p143 = pneg %p142
      // Predicated region
      $region9: #{tpu_custom_call.1} parent=5 // pred_check
        _
      $region10: #{tpu_custom_call.1} parent=5 // pred_check_branch
        %145 = sbr.rel (%p142) target = $region12
      $region11: #{tpu_custom_call.1} parent=5 // pred_region
        %s146 = ssub.s32 %s16, 1
        // Predicated region
        $region13: #{tpu_custom_call.1} parent=11 // pred_check
          %p147 = pneg %p54
        $region14: #{tpu_custom_call.1} parent=11 // pred_check_branch
          %149 = sbr.rel (%p147) target = $region16
        $region15: #{tpu_custom_call.1} parent=11 // pred_region
          %p150 = scmp.lt.s32.totalorder %s26, 0
          %s151 = scalar_select %p150, %s26, 0
          %s152 = smul.addr %s151, 8
          %s153 = scalar_lea.vmem %s0, %s152
        $region16: #{tpu_custom_call.1} parent=11 // pred_fallthru
          _
        // Predicated region
        $region17: #{tpu_custom_call.1} parent=11 // pred_check
          %p154 = pneg %p80
        $region18: #{tpu_custom_call.1} parent=11 // pred_check_branch
          %156 = sbr.rel (%p154) target = $region20
        $region19: #{tpu_custom_call.1} parent=11 // pred_region
          %p157 = scmp.lt.s32.totalorder %s26, 0
          %s158 = scalar_select %p157, %s26, 0
          %s159 = scalar_lea.vmem %s1, %s158
        $region20: #{tpu_custom_call.1} parent=11 // pred_fallthru
          _
      $region12: #{tpu_custom_call.1} parent=5 // pred_fallthru
        _
      %p160 = scmp.lt.s32.totalorder %s16, 2
      // Predicated region
      $region21: #{tpu_custom_call.1} parent=5 // pred_check
        %p161 = pneg %p160
      $region22: #{tpu_custom_call.1} parent=5 // pred_check_branch
        %163 = sbr.rel (%p161) target = $region24
      $region23: #{tpu_custom_call.1} parent=5 // pred_region
        _
      $region24: #{tpu_custom_call.1} parent=5 // pred_fallthru
        _
      %p164 = scmp.le.s32.totalorder 1, %s16
      %p165 = scmp.lt.s32.totalorder %s16, 3
      %p166 = pnand %p164, %p165
      %p167 = pneg %p166
      // Predicated region
      $region25: #{tpu_custom_call.1} parent=5 // pred_check
        _
      $region26: #{tpu_custom_call.1} parent=5 // pred_check_branch
        %169 = sbr.rel (%p166) target = $region28
      $region27: #{tpu_custom_call.1} parent=5 // pred_region
        %s170 = ssub.s32 %s16, 1
        %p171 = scmp.lt.s32.totalorder %s26, 0
        %s172 = scalar_select %p171, %s26, 0
        %s173 = smul.addr %s172, 8
        %s174 = scalar_lea.vmem %s0, %s173
        %p175 = pneg %p54
        %p176 = pneg %p51
        %p177 = scmp.lt.s32.totalorder %s26, 0
        %s178 = scalar_select %p177, %s26, 0
        %s179 = scalar_lea.vmem %s1, %s178
        %p180 = pneg %p80
        %p181 = pneg %p77
        %p182 = pneg %p106
        %p183 = pneg %p103
        %s184 = sand.u32 %s93, 1
        %s185 = scalar_lea.sflag [#allocation5], %s184
        %s186 = sand.u32 %s93, 1
        %s187 = smul.addr %s186, 8
        %s188 = scalar_lea.vmem [#allocation4], %s187
        %p189 = pneg %p132
        %p190 = pneg %p129
        %s191 = sand.u32 %s119, 1
        %s192 = scalar_lea.sflag [#allocation7], %s191
        %s193 = sand.u32 %s119, 1
        %s194 = smul.addr %s193, 8
        %s195 = scalar_lea.vmem [#allocation6], %s194
        %p196 = scmp.lt.s32.totalorder %s26, 0
        %s197 = scalar_select %p196, %s26, 0
        %s198 = smul.addr %s197, 8
        %s199 = scalar_lea.vmem %s0, %s198
        %p200 = scmp.lt.s32.totalorder %s26, 0
        %s201 = scalar_select %p200, %s26, 0
        %s202 = scalar_lea.vmem %s1, %s201
        %p203 = scmp.eq.s32.totalorder %s26, 0
        // Predicated region
        $region29: #{tpu_custom_call.1} parent=27 // pred_check
          %p204 = pneg %p203
        $region30: #{tpu_custom_call.1} parent=27 // pred_check_branch
          %206 = sbr.rel (%p204) target = $region32
        $region31: #{tpu_custom_call.1} parent=27 // pred_region
          %vm207 = vcmask 57344
          %208 = vst.msk [vmem:[#allocation2] sm:$0x1] %vm207, 0.0
          %209 = vst.msk [vmem:[#allocation3] sm:$0x1] %vm207, 0.0
        $region32: #{tpu_custom_call.1} parent=27 // pred_fallthru
          _
        %v210 = vld [vmem:[%s199] sm:$0xff]
        %v211 = vld [vmem:[%s199 + $0x8] sm:$0xff]
        %v212 = vld [vmem:[%s202] sm:$0x1]
        %v213 = vlaneseq
        %v214 = vand.u32 %v213, 127
        %s215 = smul.u32 %s26, 8
        %v216 = vstv %s215
        %v217 = vadd.s32 %v216, %v214
        %vm218 = vcmp.lt.s32.totalorder %v217, 8
        %p219 = scmp.eq.s32.totalorder %s25, 0
        %p220 = scmp.ge.s32.totalorder %s26, 1
        %p221 = por %p219, %p220
        %s222 = scalar_select %p221, 1, 0
        %v223 = vstv %s222
        %vm224 = vcmp.eq.s32.totalorder %v223, 1
        %vm225 = vmand %vm218, %vm224
        %vm226 = vcmask 64512
        %v227 = vsel %vm226, %v210, -inf
        %v228 = vsel %vm226, %v211, -inf
        %v229 = vmax.f32 %v227, %v228
        %v230 = vrot.slane %v229, 4
        %v231 = vmax.f32 %v229, %v230
        %v232 = vrot.slane %v231, 2
        %v233 = vmax.f32 %v231, %v232
        %v234 = vrot.slane %v233, 1
        %v235 = vmax.f32 %v233, %v234
        %v236 = vlaneseq
        %v237 = vshrl.u32 %v236, 7
        %v238 = vadd.s32 %v237, 8
        %v239 = vlaneseq
        %v240 = vshrl.u32 %v239, 7
        %v241 = vsub.s32 0, %v240
        %v242 = vrot.slane %v212, %v241
        %vm243 = vcmp.eq.s32.totalorder %v237, %v242
        %vm244 = vcmp.eq.s32.totalorder %v238, %v242
        %v245 = vsel %vm243, %v210, 0.0
        %v246 = vsel %vm244, %v211, 0.0
        %v247 = vsel %vm226, %v245, 0.0
        %v248 = vsel %vm226, %v246, 0.0
        %v249 = vadd.f32 %v247, %v248
        %v250 = vrot.slane %v249, 4
        %v251 = vadd.f32 %v249, %v250
        %v252 = vrot.slane %v251, 2
        %v253 = vadd.f32 %v251, %v252
        %v254 = vrot.slane %v253, 1
        %v255 = vadd.f32 %v253, %v254
        %v256 = vsub.f32 %v210, %v235
        %v257 = vsub.f32 %v211, %v235
        %v258 = vmul.f32 %v256, 1.442695
        %v259 = vpow.pop %v258
        %v260 = vmul.f32 %v257, 1.442695
        %v261 = vpow.pop %v260
        %v262 = vsel %vm243, 0.0, %v259
        %v263 = vsel %vm244, 0.0, %v261
        %v264 = vsel %vm226, %v262, 0.0
        %v265 = vsel %vm226, %v263, 0.0
        %v266 = vadd.f32 %v264, %v265
        %v267 = vrot.slane %v266, 4
        %v268 = vadd.f32 %v266, %v267
        %v269 = vrot.slane %v268, 2
        %v270 = vadd.f32 %v268, %v269
        %v271 = vrot.slane %v270, 1
        %v272 = vadd.f32 %v270, %v271
        %v273 = vsub.f32 %v255, %v235
        %v274 = vmul.f32 %v273, 1.442695
        %v275 = vpow.pop %v274
        %v276 = vadd.f32 %v272, %v275
        %v277 = vlog2.pop %v276
        %v278 = vmul.f32 %v277, 0.6931472
        %v279 = vadd.f32 %v278, %v235
        %v280 = vsub.f32 %v279, %v255
        %v281 = vsel %vm225, %v280, 0.0
        %v282 = vrcp.pop %v276
        %v283 = vmul.f32 %v272, %v282
        %v284 = vsel %vm225, %v283, 0.0
        %v285 = vld [vmem:[#allocation2] sm:$0x1]
        %v286 = vmul.f32 %v284, %v281
        %v287 = vadd.f32 %v285, %v286
        %vm288 = vcmask 57344
        %289 = vst.msk [vmem:[#allocation2] sm:$0x1] %vm288, %v287
        %v290 = vld [vmem:[#allocation3] sm:$0x1]
        %v291 = vadd.f32 %v290, %v284
        %292 = vst.msk [vmem:[#allocation3] sm:$0x1] %vm288, %v291
        // Predicated region
        $region33: #{tpu_custom_call.1} parent=27 // pred_check
          %p293 = pneg %p203
        $region34: #{tpu_custom_call.1} parent=27 // pred_check_branch
          %295 = sbr.rel (%p293) target = $region36
        $region35: #{tpu_custom_call.1} parent=27 // pred_region
          %v296 = vld [vmem:[#allocation2] sm:$0x1]
          %v297 = vsel %vm288, %v296, 0.0
          %298 = vadd.xlane.f32.xlu0 %v297
          %v299 = vpop.xlane.xlu0 %298
          %v300 = vld [vmem:[#allocation3] sm:$0x1]
          %v301 = vsel %vm288, %v300, 0.0
          %302 = vadd.xlane.f32.xlu0 %v301
          %v303 = vpop.xlane.xlu0 %302
          %v304 = vlaneseq
          %v305 = vshrl.u32 %v304, 7
          %v306 = vsub.s32 0, %v305
          %v307 = vrot.slane %v299, %v306
          %308 = vst [vmem:[%s188] sm:$0xff] %v307
          %v309 = vlaneseq
          %v310 = vshrl.u32 %v309, 7
          %v311 = vsub.s32 0, %v310
          %v312 = vrot.slane %v303, %v311
          %313 = vst [vmem:[%s195] sm:$0xff] %v312
        $region36: #{tpu_custom_call.1} parent=27 // pred_fallthru
          _
        %s314 = sand.u32 %s93, 1
        %s315 = scalar_lea.sflag [#allocation5], %s314
        %s316 = sand.u32 %s93, 1
        %s317 = smul.addr %s316, 8
        %s318 = scalar_lea.vmem [#allocation4], %s317
        %s319 = sand.u32 %s119, 1
        %s320 = scalar_lea.sflag [#allocation7], %s319
        %s321 = sand.u32 %s119, 1
        %s322 = smul.addr %s321, 8
        %s323 = scalar_lea.vmem [#allocation6], %s322
        // Predicated region
        $region37: #{tpu_custom_call.1} parent=27 // pred_check
          %p324 = pneg %p103
        $region38: #{tpu_custom_call.1} parent=27 // pred_check_branch
          %326 = sbr.rel (%p324) target = $region40
        $region39: #{tpu_custom_call.1} parent=27 // pred_region
          %s328 = ssub.s32 128, 128
          %329 = vsyncadd %s315, %s328
          %s330 = smul.addr %s25, 128
          %s331 = scalar_lea.hbm %s2, %s330
          %s333 = sshll.u32 %s318, 4
          %s334 = int_to_ptr.vmem [resolvable:$true] %s333
          %336 = dma.vmem_to_hbm [thread:$0]  %s334, 128, %s331, %s315
        $region40: #{tpu_custom_call.1} parent=27 // pred_fallthru
          _
        // Predicated region
        $region41: #{tpu_custom_call.1} parent=27 // pred_check
          %p337 = pneg %p129
        $region42: #{tpu_custom_call.1} parent=27 // pred_check_branch
          %339 = sbr.rel (%p337) target = $region44
        $region43: #{tpu_custom_call.1} parent=27 // pred_region
          %s341 = ssub.s32 128, 128
          %342 = vsyncadd %s320, %s341
          %s343 = smul.addr %s25, 128
          %s344 = scalar_lea.hbm %s3, %s343
          %s346 = sshll.u32 %s323, 4
          %s347 = int_to_ptr.vmem [resolvable:$true] %s346
          %349 = dma.vmem_to_hbm [thread:$0]  %s347, 128, %s344, %s320
        $region44: #{tpu_custom_call.1} parent=27 // pred_fallthru
          _
      $region28: #{tpu_custom_call.1} parent=5 // pred_fallthru
        _
      %p350 = scmp.le.s32.totalorder 2, %s16
      // Predicated region
      $region45: #{tpu_custom_call.1} parent=5 // pred_check
        %p351 = pneg %p350
      $region46: #{tpu_custom_call.1} parent=5 // pred_check_branch
        %353 = sbr.rel (%p351) target = $region48
      $region47: #{tpu_custom_call.1} parent=5 // pred_region
        %s354 = ssub.s32 %s16, 2
        // Predicated region
        $region49: #{tpu_custom_call.1} parent=47 // pred_check
          %p355 = pneg %p109
        $region50: #{tpu_custom_call.1} parent=47 // pred_check_branch
          %357 = sbr.rel (%p355) target = $region52
        $region51: #{tpu_custom_call.1} parent=47 // pred_region
          %s358 = sand.u32 %s94, 1
          %s359 = scalar_lea.sflag [#allocation5], %s358
          %s360 = sand.u32 %s94, 1
          %s361 = smul.addr %s360, 8
          %s362 = scalar_lea.vmem [#allocation4], %s361
          %363 = dma.done %s359, 128
        $region52: #{tpu_custom_call.1} parent=47 // pred_fallthru
          _
        // Predicated region
        $region53: #{tpu_custom_call.1} parent=47 // pred_check
          %p364 = pneg %p135
        $region54: #{tpu_custom_call.1} parent=47 // pred_check_branch
          %366 = sbr.rel (%p364) target = $region56
        $region55: #{tpu_custom_call.1} parent=47 // pred_region
          %s367 = sand.u32 %s120, 1
          %s368 = scalar_lea.sflag [#allocation7], %s367
          %s369 = sand.u32 %s120, 1
          %s370 = smul.addr %s369, 8
          %s371 = scalar_lea.vmem [#allocation6], %s370
          %372 = dma.done %s368, 128
        $region56: #{tpu_custom_call.1} parent=47 // pred_fallthru
          _
      $region48: #{tpu_custom_call.1} parent=5 // pred_fallthru
        _
    $region6: #{tpu_custom_call.1} parent=1 // loop_footer
      %s20 = sadd.s32 1, %s16
    $region7: #{tpu_custom_call.1} parent=1 // loop_footer_branch
      %15 = sbr.rel target = $region3
    $region8: #{tpu_custom_call.1} parent=1 // loop_exit
      _
    %373 = vsyncpa [#allocation5], 1
    %s374 = scalar_lea.sflag [#allocation5], 1
    %375 = vsyncpa %s374, 1
    %376 = vsyncpa [#allocation7], 1
    %s377 = scalar_lea.sflag [#allocation7], 1
    %378 = vsyncpa %s377, 1

</llo_original>
